<compile_context>
chip_gen: v6e
topology: v6e:2x2x1
jax: 0.10.0
libtpu: 0.0.40
codegen_flags: <defaults>
</compile_context>

<pallas_src>
import functools

import jax
import jax.numpy as jnp
from jax.experimental import pallas as pl
from jax.experimental.pallas import tpu as pltpu


def _rnn_seq_kernel(x_ref, h0_ref,                 # VMEM: (T, obs) bf16, (1, nh) f32
                    wix_ref, wih_ref, bi_ref,      # VMEM: (obs, nh) bf16, (nh, nh) bf16, (1, nh) f32
                    wo_ref, bo_ref,                # VMEM: (nh, out) bf16, (1, out) f32
                    out_ref, h_out_ref,            # VMEM: (T, out) f32, (1, nh) f32
                    h_all_ref,                     # VMEM scratch: (T, nh) f32
                    *, n_steps):
    # Batched input projection for all T steps: one MXU matmul fills the
    # sublane (M) dimension instead of T tiny (1, obs) matmuls.
    x_pre = jnp.dot(x_ref[...], wix_ref[...],
                    preferred_element_type=jnp.float32) + bi_ref[...]

    wih = wih_ref[...]                             # stays resident in vregs

    # Serial recurrence: only h @ Wih is order-dependent.  n_steps is a
    # compile-time constant, so fully unroll (static slices, no loop overhead).
    h = h0_ref[...]                                # (1, nh) float32 carry
    for i in range(n_steps):
        pre = x_pre[i:i + 1, :] + jnp.dot(h.astype(jnp.bfloat16), wih,
                                          preferred_element_type=jnp.float32)
        h = jnp.tanh(pre)                          # module: h = tanh(i2h(cat(x, h)))
        h_all_ref[i:i + 1, :] = h

    # Batched output projection for all T steps: out_t = h2o(h_t).
    out_ref[...] = (jnp.dot(h_all_ref[...].astype(jnp.bfloat16), wo_ref[...],
                            preferred_element_type=jnp.float32)
                    + bo_ref[...]).astype(out_ref.dtype)
    h_out_ref[...] = h.astype(h_out_ref.dtype)


def prepare_params(params, obs_dim):
    """One-time weight prep (outside the per-call path): transpose to
    (in, out), split i2h into its x / h halves, cast MXU operands to bf16."""
    wi_t = params["i2h_w"].T                       # (obs+nh, nh)
    return {
        "wix": wi_t[:obs_dim, :].astype(jnp.bfloat16),        # (obs, nh)
        "wih": wi_t[obs_dim:, :].astype(jnp.bfloat16),        # (nh, nh)
        "bi":  params["i2h_b"].reshape(1, -1).astype(jnp.float32),
        "wo":  params["h2o_w"].T.astype(jnp.bfloat16),        # (nh, out)
        "bo":  params["h2o_b"].reshape(1, -1).astype(jnp.float32),
    }


@jax.jit
def rnn_forward(x_seq, h0, prep):
    """Applies the RNN module step-by-step over a sequence in one kernel.

    x_seq: (T, obs_dim) float32, h0: (nhidden,) float32.
    Returns (out_seq, h_final) with shapes (T, out_dim), (nhidden,),
    identical to calling the module's forward(x_t, h) T times.
    """
    T, _ = x_seq.shape
    nhidden = h0.shape[0]
    out_dim = prep["wo"].shape[1]

    vmem = pl.BlockSpec(memory_space=pltpu.MemorySpace.VMEM)

    out_seq, h_new = pl.pallas_call(
        functools.partial(_rnn_seq_kernel, n_steps=T),
        out_shape=(
            jax.ShapeDtypeStruct((T, out_dim), jnp.float32),
            jax.ShapeDtypeStruct((1, nhidden), jnp.float32),
        ),
        in_specs=[vmem] * 7,
        out_specs=(vmem, vmem),
        scratch_shapes=[pltpu.VMEM((T, nhidden), jnp.float32)],
    )(x_seq.astype(jnp.bfloat16),
      h0.reshape(1, nhidden).astype(jnp.float32),
      prep["wix"], prep["wih"], prep["bi"],
      prep["wo"], prep["bo"])

    return out_seq, h_new.reshape(nhidden)


def _rnn_reference(x_seq, h0, prep):
    """Pure-JAX reference using the same bf16-operand / f32-accum scheme."""
    x_pre = jnp.dot(x_seq.astype(jnp.bfloat16), prep["wix"],
                    preferred_element_type=jnp.float32) + prep["bi"][0]
    h = h0.astype(jnp.float32)
    hs = []
    for i in range(x_seq.shape[0]):
        pre = x_pre[i] + jnp.dot(h.astype(jnp.bfloat16), prep["wih"],
                                 preferred_element_type=jnp.float32)
        h = jnp.tanh(pre)
        hs.append(h)
    h_all = jnp.stack(hs)
    out = jnp.dot(h_all.astype(jnp.bfloat16), prep["wo"],
                  preferred_element_type=jnp.float32) + prep["bo"][0]
    return out, h


if __name__ == "__main__":
    obs_dim, nhidden, out_dim, seq_len = 32, 32, 16, 8

    key = jax.random.PRNGKey(0)
    k_wi, k_bi, k_wo, k_bo, k_x = jax.random.split(key, 5)

    bi_bound = 1.0 / (obs_dim + nhidden) ** 0.5
    bo_bound = 1.0 / nhidden ** 0.5
    params = {  # nn.Linear-style uniform init, deterministic from PRNGKey(0)
        "i2h_w": jax.random.uniform(k_wi, (nhidden, obs_dim + nhidden),
                                    jnp.float32, -bi_bound, bi_bound),
        "i2h_b": jax.random.uniform(k_bi, (nhidden,), jnp.float32,
                                    -bi_bound, bi_bound),
        "h2o_w": jax.random.uniform(k_wo, (out_dim, nhidden), jnp.float32,
                                    -bo_bound, bo_bound),
        "h2o_b": jax.random.uniform(k_bo, (out_dim,), jnp.float32,
                                    -bo_bound, bo_bound),
    }
    prep = prepare_params(params, obs_dim)

    x_seq = jax.random.normal(k_x, (seq_len, obs_dim), jnp.float32)
    h0 = jnp.zeros((nhidden,), jnp.float32)        # RNN.initHidden()

    out_seq, h_new = rnn_forward(x_seq, h0, prep)
    jax.block_until_ready((out_seq, h_new))

    ref_out, ref_h = _rnn_reference(x_seq, h0, prep)

    assert out_seq.shape == (seq_len, out_dim)
    assert h_new.shape == (nhidden,)
    assert bool(jnp.all(jnp.isfinite(out_seq))) and bool(jnp.all(jnp.isfinite(h_new)))
    assert jnp.allclose(out_seq, ref_out, atol=1e-2, rtol=1e-2)
    assert jnp.allclose(h_new, ref_h, atol=1e-2, rtol=1e-2)
    print("KERNEL_OK")
</pallas_src>

<mosaic_0001>
module attributes {stable_mosaic.version = 11 : i64} {
  func.func @_rnn_seq_kernel(%arg0: memref<8x32xbf16, #tpu.memory_space<vmem>>, %arg1: memref<1x32xf32, #tpu.memory_space<vmem>>, %arg2: memref<32x32xbf16, #tpu.memory_space<vmem>>, %arg3: memref<32x32xbf16, #tpu.memory_space<vmem>>, %arg4: memref<1x32xf32, #tpu.memory_space<vmem>>, %arg5: memref<32x16xbf16, #tpu.memory_space<vmem>>, %arg6: memref<1x16xf32, #tpu.memory_space<vmem>>, %arg7: memref<8x16xf32, #tpu.memory_space<vmem>>, %arg8: memref<1x32xf32, #tpu.memory_space<vmem>>, %arg9: memref<8x32xf32, #tpu.memory_space<vmem>>) attributes {dimension_semantics = [], scalar_prefetch = 0 : i64, scratch_operands = 1 : i64, tpu.core_type = #tpu.core_type<tc>} {
    %c0 = arith.constant 0 : index
    %c0_0 = arith.constant 0 : index
    %0 = vector.load %arg0[%c0, %c0_0] : memref<8x32xbf16, #tpu.memory_space<vmem>>, vector<8x32xbf16>
    %c0_1 = arith.constant 0 : index
    %c0_2 = arith.constant 0 : index
    %1 = vector.load %arg2[%c0_1, %c0_2] : memref<32x32xbf16, #tpu.memory_space<vmem>>, vector<32x32xbf16>
    %cst = arith.constant dense<0.000000e+00> : vector<8x32xf32>
    %2 = tpu.matmul %0, %1, %cst {dimension_numbers = #tpu.dot_dimension_numbers<[1], [0], [0], [1], [0, 0, 1, 1], [], []>} : vector<8x32xbf16>, vector<32x32xbf16>, vector<8x32xf32> -> vector<8x32xf32>
    %c0_3 = arith.constant 0 : index
    %c0_4 = arith.constant 0 : index
    %3 = vector.load %arg4[%c0_3, %c0_4] : memref<1x32xf32, #tpu.memory_space<vmem>>, vector<1x32xf32>
    %4 = vector.broadcast %3 : vector<1x32xf32> to vector<8x32xf32>
    %5 = arith.addf %2, %4 : vector<8x32xf32>
    %c0_5 = arith.constant 0 : index
    %c0_6 = arith.constant 0 : index
    %6 = vector.load %arg3[%c0_5, %c0_6] : memref<32x32xbf16, #tpu.memory_space<vmem>>, vector<32x32xbf16>
    %c0_7 = arith.constant 0 : index
    %c0_8 = arith.constant 0 : index
    %7 = vector.load %arg1[%c0_7, %c0_8] : memref<1x32xf32, #tpu.memory_space<vmem>>, vector<1x32xf32>
    %8 = vector.extract_strided_slice %5 {offsets = [0, 0], sizes = [1, 32], strides = [1, 1]} : vector<8x32xf32> to vector<1x32xf32>
    %9 = arith.truncf %7 : vector<1x32xf32> to vector<1x32xbf16>
    %cst_9 = arith.constant dense<0.000000e+00> : vector<1x32xf32>
    %10 = tpu.matmul %9, %6, %cst_9 {dimension_numbers = #tpu.dot_dimension_numbers<[1], [0], [0], [1], [0, 0, 1, 1], [], []>} : vector<1x32xbf16>, vector<32x32xbf16>, vector<1x32xf32> -> vector<1x32xf32>
    %11 = arith.addf %8, %10 : vector<1x32xf32>
    %12 = math.tanh %11 : vector<1x32xf32>
    %c0_10 = arith.constant 0 : index
    %c0_11 = arith.constant 0 : index
    %13 = vector.load %arg9[%c0_10, %c0_11] : memref<8x32xf32, #tpu.memory_space<vmem>>, vector<1x32xf32>
    tpu.vector_store %arg9[%c0_10, %c0_11], %12 {strides = array<i32>} : memref<8x32xf32, #tpu.memory_space<vmem>>, vector<1x32xf32>,
    %14 = vector.extract_strided_slice %5 {offsets = [1, 0], sizes = [1, 32], strides = [1, 1]} : vector<8x32xf32> to vector<1x32xf32>
    %15 = arith.truncf %12 : vector<1x32xf32> to vector<1x32xbf16>
    %cst_12 = arith.constant dense<0.000000e+00> : vector<1x32xf32>
    %16 = tpu.matmul %15, %6, %cst_12 {dimension_numbers = #tpu.dot_dimension_numbers<[1], [0], [0], [1], [0, 0, 1, 1], [], []>} : vector<1x32xbf16>, vector<32x32xbf16>, vector<1x32xf32> -> vector<1x32xf32>
    %17 = arith.addf %14, %16 : vector<1x32xf32>
    %18 = math.tanh %17 : vector<1x32xf32>
    %c1 = arith.constant 1 : index
    %c0_13 = arith.constant 0 : index
    %19 = vector.load %arg9[%c1, %c0_13] : memref<8x32xf32, #tpu.memory_space<vmem>>, vector<1x32xf32>
    tpu.vector_store %arg9[%c1, %c0_13], %18 {strides = array<i32>} : memref<8x32xf32, #tpu.memory_space<vmem>>, vector<1x32xf32>,
    %20 = vector.extract_strided_slice %5 {offsets = [2, 0], sizes = [1, 32], strides = [1, 1]} : vector<8x32xf32> to vector<1x32xf32>
    %21 = arith.truncf %18 : vector<1x32xf32> to vector<1x32xbf16>
    %cst_14 = arith.constant dense<0.000000e+00> : vector<1x32xf32>
    %22 = tpu.matmul %21, %6, %cst_14 {dimension_numbers = #tpu.dot_dimension_numbers<[1], [0], [0], [1], [0, 0, 1, 1], [], []>} : vector<1x32xbf16>, vector<32x32xbf16>, vector<1x32xf32> -> vector<1x32xf32>
    %23 = arith.addf %20, %22 : vector<1x32xf32>
    %24 = math.tanh %23 : vector<1x32xf32>
    %c2 = arith.constant 2 : index
    %c0_15 = arith.constant 0 : index
    %25 = vector.load %arg9[%c2, %c0_15] : memref<8x32xf32, #tpu.memory_space<vmem>>, vector<1x32xf32>
    tpu.vector_store %arg9[%c2, %c0_15], %24 {strides = array<i32>} : memref<8x32xf32, #tpu.memory_space<vmem>>, vector<1x32xf32>,
    %26 = vector.extract_strided_slice %5 {offsets = [3, 0], sizes = [1, 32], strides = [1, 1]} : vector<8x32xf32> to vector<1x32xf32>
    %27 = arith.truncf %24 : vector<1x32xf32> to vector<1x32xbf16>
    %cst_16 = arith.constant dense<0.000000e+00> : vector<1x32xf32>
    %28 = tpu.matmul %27, %6, %cst_16 {dimension_numbers = #tpu.dot_dimension_numbers<[1], [0], [0], [1], [0, 0, 1, 1], [], []>} : vector<1x32xbf16>, vector<32x32xbf16>, vector<1x32xf32> -> vector<1x32xf32>
    %29 = arith.addf %26, %28 : vector<1x32xf32>
    %30 = math.tanh %29 : vector<1x32xf32>
    %c3 = arith.constant 3 : index
    %c0_17 = arith.constant 0 : index
    %31 = vector.load %arg9[%c3, %c0_17] : memref<8x32xf32, #tpu.memory_space<vmem>>, vector<1x32xf32>
    tpu.vector_store %arg9[%c3, %c0_17], %30 {strides = array<i32>} : memref<8x32xf32, #tpu.memory_space<vmem>>, vector<1x32xf32>,
    %32 = vector.extract_strided_slice %5 {offsets = [4, 0], sizes = [1, 32], strides = [1, 1]} : vector<8x32xf32> to vector<1x32xf32>
    %33 = arith.truncf %30 : vector<1x32xf32> to vector<1x32xbf16>
    %cst_18 = arith.constant dense<0.000000e+00> : vector<1x32xf32>
    %34 = tpu.matmul %33, %6, %cst_18 {dimension_numbers = #tpu.dot_dimension_numbers<[1], [0], [0], [1], [0, 0, 1, 1], [], []>} : vector<1x32xbf16>, vector<32x32xbf16>, vector<1x32xf32> -> vector<1x32xf32>
    %35 = arith.addf %32, %34 : vector<1x32xf32>
    %36 = math.tanh %35 : vector<1x32xf32>
    %c4 = arith.constant 4 : index
    %c0_19 = arith.constant 0 : index
    %37 = vector.load %arg9[%c4, %c0_19] : memref<8x32xf32, #tpu.memory_space<vmem>>, vector<1x32xf32>
    tpu.vector_store %arg9[%c4, %c0_19], %36 {strides = array<i32>} : memref<8x32xf32, #tpu.memory_space<vmem>>, vector<1x32xf32>,
    %38 = vector.extract_strided_slice %5 {offsets = [5, 0], sizes = [1, 32], strides = [1, 1]} : vector<8x32xf32> to vector<1x32xf32>
    %39 = arith.truncf %36 : vector<1x32xf32> to vector<1x32xbf16>
    %cst_20 = arith.constant dense<0.000000e+00> : vector<1x32xf32>
    %40 = tpu.matmul %39, %6, %cst_20 {dimension_numbers = #tpu.dot_dimension_numbers<[1], [0], [0], [1], [0, 0, 1, 1], [], []>} : vector<1x32xbf16>, vector<32x32xbf16>, vector<1x32xf32> -> vector<1x32xf32>
    %41 = arith.addf %38, %40 : vector<1x32xf32>
    %42 = math.tanh %41 : vector<1x32xf32>
    %c5 = arith.constant 5 : index
    %c0_21 = arith.constant 0 : index
    %43 = vector.load %arg9[%c5, %c0_21] : memref<8x32xf32, #tpu.memory_space<vmem>>, vector<1x32xf32>
    tpu.vector_store %arg9[%c5, %c0_21], %42 {strides = array<i32>} : memref<8x32xf32, #tpu.memory_space<vmem>>, vector<1x32xf32>,
    %44 = vector.extract_strided_slice %5 {offsets = [6, 0], sizes = [1, 32], strides = [1, 1]} : vector<8x32xf32> to vector<1x32xf32>
    %45 = arith.truncf %42 : vector<1x32xf32> to vector<1x32xbf16>
    %cst_22 = arith.constant dense<0.000000e+00> : vector<1x32xf32>
    %46 = tpu.matmul %45, %6, %cst_22 {dimension_numbers = #tpu.dot_dimension_numbers<[1], [0], [0], [1], [0, 0, 1, 1], [], []>} : vector<1x32xbf16>, vector<32x32xbf16>, vector<1x32xf32> -> vector<1x32xf32>
    %47 = arith.addf %44, %46 : vector<1x32xf32>
    %48 = math.tanh %47 : vector<1x32xf32>
    %c6 = arith.constant 6 : index
    %c0_23 = arith.constant 0 : index
    %49 = vector.load %arg9[%c6, %c0_23] : memref<8x32xf32, #tpu.memory_space<vmem>>, vector<1x32xf32>
    tpu.vector_store %arg9[%c6, %c0_23], %48 {strides = array<i32>} : memref<8x32xf32, #tpu.memory_space<vmem>>, vector<1x32xf32>,
    %50 = vector.extract_strided_slice %5 {offsets = [7, 0], sizes = [1, 32], strides = [1, 1]} : vector<8x32xf32> to vector<1x32xf32>
    %51 = arith.truncf %48 : vector<1x32xf32> to vector<1x32xbf16>
    %cst_24 = arith.constant dense<0.000000e+00> : vector<1x32xf32>
    %52 = tpu.matmul %51, %6, %cst_24 {dimension_numbers = #tpu.dot_dimension_numbers<[1], [0], [0], [1], [0, 0, 1, 1], [], []>} : vector<1x32xbf16>, vector<32x32xbf16>, vector<1x32xf32> -> vector<1x32xf32>
    %53 = arith.addf %50, %52 : vector<1x32xf32>
    %54 = math.tanh %53 : vector<1x32xf32>
    %c7 = arith.constant 7 : index
    %c0_25 = arith.constant 0 : index
    %55 = vector.load %arg9[%c7, %c0_25] : memref<8x32xf32, #tpu.memory_space<vmem>>, vector<1x32xf32>
    tpu.vector_store %arg9[%c7, %c0_25], %54 {strides = array<i32>} : memref<8x32xf32, #tpu.memory_space<vmem>>, vector<1x32xf32>,
    %c0_26 = arith.constant 0 : index
    %c0_27 = arith.constant 0 : index
    %56 = vector.load %arg9[%c0_26, %c0_27] : memref<8x32xf32, #tpu.memory_space<vmem>>, vector<8x32xf32>
    %57 = arith.truncf %56 : vector<8x32xf32> to vector<8x32xbf16>
    %c0_28 = arith.constant 0 : index
    %c0_29 = arith.constant 0 : index
    %58 = vector.load %arg5[%c0_28, %c0_29] : memref<32x16xbf16, #tpu.memory_space<vmem>>, vector<32x16xbf16>
    %cst_30 = arith.constant dense<0.000000e+00> : vector<8x16xf32>
    %59 = tpu.matmul %57, %58, %cst_30 {dimension_numbers = #tpu.dot_dimension_numbers<[1], [0], [0], [1], [0, 0, 1, 1], [], []>} : vector<8x32xbf16>, vector<32x16xbf16>, vector<8x16xf32> -> vector<8x16xf32>
    %c0_31 = arith.constant 0 : index
    %c0_32 = arith.constant 0 : index
    %60 = vector.load %arg6[%c0_31, %c0_32] : memref<1x16xf32, #tpu.memory_space<vmem>>, vector<1x16xf32>
    %61 = vector.broadcast %60 : vector<1x16xf32> to vector<8x16xf32>
    %62 = arith.addf %59, %61 : vector<8x16xf32>
    %c0_33 = arith.constant 0 : index
    %c0_34 = arith.constant 0 : index
    %63 = vector.load %arg7[%c0_33, %c0_34] : memref<8x16xf32, #tpu.memory_space<vmem>>, vector<8x16xf32>
    tpu.vector_store %arg7[%c0_33, %c0_34], %62 {strides = array<i32>} : memref<8x16xf32, #tpu.memory_space<vmem>>, vector<8x16xf32>,
    %c0_35 = arith.constant 0 : index
    %c0_36 = arith.constant 0 : index
    %64 = vector.load %arg8[%c0_35, %c0_36] : memref<1x32xf32, #tpu.memory_space<vmem>>, vector<1x32xf32>
    tpu.vector_store %arg8[%c0_35, %c0_36], %54 {strides = array<i32>} : memref<1x32xf32, #tpu.memory_space<vmem>>, vector<1x32xf32>,
    return
  }
}

</mosaic_0001>

<llo_original>
// kernel: rnn_forward.1
$region0: #{rnn_forward.1}
  #allocation0 [shape = 'u32[]', space=smem, size = 0x4, offset = 0x4, fixed_abs, tag = 'smem constant byte address 0x4 - core index']
  #allocation1 [shape = 'u32[144,128]{1,0:T(1,128)}', space=vmem, size = 0x12000, scoped, tag = 'internal scratch']
  #allocation2 [shape = 'f32[8,32]{1,0:T(8,128)}', space=vmem, size = 0x1000, scoped, tag = 'scratch operand']
  %s0 = inlined_call_operand.vmem [shape: bf16[8,32], index: 0, kind: input, shape index: {}]
  %s1 = inlined_call_operand.vmem [shape: f32[1,32], index: 1, kind: input, shape index: {}]
  %s2 = inlined_call_operand.vmem [shape: bf16[32,32], index: 2, kind: input, shape index: {}]
  %s3 = inlined_call_operand.vmem [shape: bf16[32,32], index: 3, kind: input, shape index: {}]
  %s4 = inlined_call_operand.hbm [shape: f32[1,32], index: 4, kind: input, shape index: {}]
  %s5 = inlined_call_operand.vmem [shape: bf16[32,16], index: 5, kind: input, shape index: {}]
  %s6 = inlined_call_operand.vmem [shape: f32[1,16], index: 6, kind: input, shape index: {}]
  %s7 = inlined_call_operand.hbm [shape: f32[8,16], index: 7, kind: output, shape index: {0}]
  %s8 = inlined_call_operand.hbm [shape: f32[1,32], index: 8, kind: output, shape index: {1}]
  %9 = xla_tuple %s7, %s8
  %s10 = sld [smem:[#allocation0]]
  $region50: #{rnn_forward.1} parent=0
    _
  %s12 = ssub.s32 1, %s10
  %s13 = scalar_select 0, %s12, %s10
  $region1: #{rnn_forward.1} parent=0
    #allocation3 [shape = 'u8[512]{0}', space=vmem, size = 0x400, scoped, tag = 'input window, operand 4, single buffered']
    #allocation4 [shape = 's32[1]{0}', space=sflag, size = 0x4, scoped, tag = 'scoped memory for rnn_forward.1']
    #allocation5 [shape = 's32[1]{0}', space=sflag, size = 0x4, scoped, tag = 'scoped memory for rnn_forward.1']
    #allocation6 [shape = 'u8[4096]{0}', space=vmem, size = 0x1000, scoped, tag = 'output window, operand 0, single buffered']
    #allocation7 [shape = 'u8[512]{0}', space=vmem, size = 0x400, scoped, tag = 'output window, operand 1, single buffered']
    #allocation8 [shape = 's32[1]{0}', space=sflag, size = 0x4, scoped, tag = 'scoped memory for rnn_forward.1']
    %14 = vsyncpa [#allocation4], 0
    %15 = vsyncpa [#allocation5], 0
    %16 = vsyncpa [#allocation8], 0
    // Predicated region
    $region2: #{rnn_forward.1} parent=1 // pred_check
      _
    $region3: #{rnn_forward.1} parent=1 // pred_check_branch
      %18 = sbr.rel (0) target = $region5
    $region4: #{rnn_forward.1} parent=1 // pred_region
      _
    $region5: #{rnn_forward.1} parent=1 // pred_fallthru
      _
    // Predicated region
    $region6: #{rnn_forward.1} parent=1 // pred_check
      _
    $region7: #{rnn_forward.1} parent=1 // pred_check_branch
      %20 = sbr.rel (0) target = $region9
    $region8: #{rnn_forward.1} parent=1 // pred_region
      _
    $region9: #{rnn_forward.1} parent=1 // pred_fallthru
      _
    // Predicated region
    $region10: #{rnn_forward.1} parent=1 // pred_check
      _
    $region11: #{rnn_forward.1} parent=1 // pred_check_branch
      %22 = sbr.rel (0) target = $region13
    $region12: #{rnn_forward.1} parent=1 // pred_region
      _
    $region13: #{rnn_forward.1} parent=1 // pred_fallthru
      _
    // Predicated region
    $region14: #{rnn_forward.1} parent=1 // pred_check
      _
    $region15: #{rnn_forward.1} parent=1 // pred_check_branch
      %24 = sbr.rel (0) target = $region17
    $region16: #{rnn_forward.1} parent=1 // pred_region
      _
    $region17: #{rnn_forward.1} parent=1 // pred_fallthru
      _
    // Predicated region
    $region18: #{rnn_forward.1} parent=1 // pred_check
      _
    $region19: #{rnn_forward.1} parent=1 // pred_check_branch
      %26 = sbr.rel (0) target = $region21
    $region20: #{rnn_forward.1} parent=1 // pred_region
      %s28 = ssub.s32 16, 16
      %29 = vsyncadd [#allocation4], %s28
      %s31 = sshll.u32 [#allocation3], 4
      %s32 = int_to_ptr.vmem [resolvable:$true] %s31
      %34 = dma.hbm_to_vmem [thread:$0]  %s4, 16, %s32, [#allocation4]
    $region21: #{rnn_forward.1} parent=1 // pred_fallthru
      _
    // Predicated region
    $region22: #{rnn_forward.1} parent=1 // pred_check
      _
    $region23: #{rnn_forward.1} parent=1 // pred_check_branch
      %36 = sbr.rel (0) target = $region25
    $region24: #{rnn_forward.1} parent=1 // pred_region
      _
    $region25: #{rnn_forward.1} parent=1 // pred_fallthru
      _
    // Predicated region
    $region26: #{rnn_forward.1} parent=1 // pred_check
      _
    $region27: #{rnn_forward.1} parent=1 // pred_check_branch
      %38 = sbr.rel (0) target = $region29
    $region28: #{rnn_forward.1} parent=1 // pred_region
      _
    $region29: #{rnn_forward.1} parent=1 // pred_fallthru
      _
    // Predicated region
    $region30: #{rnn_forward.1} parent=1 // pred_check
      _
    $region31: #{rnn_forward.1} parent=1 // pred_check_branch
      %40 = sbr.rel (0) target = $region33
    $region32: #{rnn_forward.1} parent=1 // pred_region
      %41 = dma.done [#allocation4], 16
    $region33: #{rnn_forward.1} parent=1 // pred_fallthru
      _
    %v43 = vld [vmem:[%s0] sm:$0xf]
    %v44 = vld [vmem:[%s2] sm:$0xf]
    %v45 = vld [vmem:[%s2 + $0x4] sm:$0xf]
    %v46 = vld [vmem:[%s2 + $0x8] sm:$0xf]
    %v47 = vld [vmem:[%s2 + $0xc] sm:$0xf]
    %v48 = vld [vmem:[#allocation3] sm:$0x1]
    %v50 = vlaneseq
    %v51 = vshrl.u32 %v50, 7
    %v52 = vsub.s32 0, %v51
    %v53 = vrot.slane %v48, %v52
    %v59 = vunpack.c.l.b16 %v44
    %v60 = vunpack.c.l.b16 %v45
    %v61 = vunpack.c.l.b16 %v46
    %v62 = vunpack.c.l.b16 %v47
    %v63 = vpack.c.b16 %v60, %v59
    %v64 = vpack.c.b16 %v62, %v61
    %vm67 = vcmask 261120
    %v69 = vsel %vm67, %v43, 0
    %71 = vmatprep.subr.bf16.mxu0 0
    %72 = vmatpush1.bf16.msra.mxu0 0
    %73 = vmatprep.subr.bf16.mxu0 0
    %74 = vmatpush1.bf16.msra.mxu0 0
    %75 = vmatprep.subr.bf16.mxu0 0
    %76 = vmatpush1.bf16.msra.mxu0 0
    %77 = vmatprep.subr.bf16.mxu0 0
    %78 = vmatpush1.bf16.msra.mxu0 0
    %79 = vmatprep.subr.bf16.mxu0 0
    %80 = vmatpush1.bf16.msra.mxu0 0
    %81 = vmatprep.subr.bf16.mxu0 0
    %82 = vmatpush1.bf16.msra.mxu0 0
    %83 = vmatprep.subr.bf16.mxu0 0
    %84 = vmatpush1.bf16.msra.mxu0 %v64
    %85 = vmatprep.subr.bf16.mxu0 0
    %86 = vmatpush1.bf16.msra.mxu0 %v63
    %87 = vmatprep.subr.bf16.mxu0 0
    %88 = vmatpush2.bf16.msra.mxu0 0
    %89 = vmatprep.subr.bf16.mxu0 0
    %90 = vmatpush2.bf16.msra.mxu0 0
    %91 = vmatprep.subr.bf16.mxu0 0
    %92 = vmatpush2.bf16.msra.mxu0 0
    %93 = vmatprep.subr.bf16.mxu0 0
    %94 = vmatpush2.bf16.msra.mxu0 0
    %95 = vmatprep.subr.bf16.mxu0 0
    %96 = vmatpush2.bf16.msra.mxu0 0
    %97 = vmatprep.subr.bf16.mxu0 0
    %98 = vmatpush2.bf16.msra.mxu0 0
    %99 = vmatprep.subr.bf16.mxu0 0
    %100 = vmatpush2.bf16.msra.mxu0 0
    %101 = vmatprep.subr.bf16.mxu0 0
    %102 = vmatpush2.bf16.msra.mxu0 0
    %103 = vmatprep.mubr.bf16.mxu0 0
    %104 = vmatmul.mubr.bf16.gmra.mxu0 %v69
    %v105 = vpop.f32.mrf.mxu0
    %v106 = vadd.f32 %v53, %v105
    %v107 = vpop.f32.mrf.mxu0
    %v108 = vpop.f32.mrf.mxu0
    %v109 = vpop.f32.mrf.mxu0
    %110 = vdwg.mxu0
    %v111 = vld [vmem:[%s3] sm:$0xf]
    %v112 = vld [vmem:[%s3 + $0x4] sm:$0xf]
    %v113 = vld [vmem:[%s3 + $0x8] sm:$0xf]
    %v114 = vld [vmem:[%s3 + $0xc] sm:$0xf]
    %v115 = vld [vmem:[%s1] sm:$0x1]
    %v116 = vpack.c.bf16 %v115, %v115
    %v121 = vunpack.c.l.b16 %v111
    %v122 = vunpack.c.l.b16 %v112
    %v123 = vunpack.c.l.b16 %v113
    %v124 = vunpack.c.l.b16 %v114
    %v125 = vpack.c.b16 %v122, %v121
    %v126 = vpack.c.b16 %v124, %v123
    %v130 = vsel %vm67, %v116, 0
    %132 = vmatprep.subr.bf16.mxu0 0
    %133 = vmatpush1.bf16.msra.mxu0 0
    %134 = vmatprep.subr.bf16.mxu0 0
    %135 = vmatpush1.bf16.msra.mxu0 0
    %136 = vmatprep.subr.bf16.mxu0 0
    %137 = vmatpush1.bf16.msra.mxu0 0
    %138 = vmatprep.subr.bf16.mxu0 0
    %139 = vmatpush1.bf16.msra.mxu0 0
    %140 = vmatprep.subr.bf16.mxu0 0
    %141 = vmatpush1.bf16.msra.mxu0 0
    %142 = vmatprep.subr.bf16.mxu0 0
    %143 = vmatpush1.bf16.msra.mxu0 0
    %144 = vmatprep.subr.bf16.mxu0 0
    %145 = vmatpush1.bf16.msra.mxu0 %v126
    %146 = vmatprep.subr.bf16.mxu0 0
    %147 = vmatpush1.bf16.msra.mxu0 %v125
    %148 = vmatprep.subr.bf16.mxu0 0
    %149 = vmatpush2.bf16.msra.mxu0 0
    %150 = vmatprep.subr.bf16.mxu0 0
    %151 = vmatpush2.bf16.msra.mxu0 0
    %152 = vmatprep.subr.bf16.mxu0 0
    %153 = vmatpush2.bf16.msra.mxu0 0
    %154 = vmatprep.subr.bf16.mxu0 0
    %155 = vmatpush2.bf16.msra.mxu0 0
    %156 = vmatprep.subr.bf16.mxu0 0
    %157 = vmatpush2.bf16.msra.mxu0 0
    %158 = vmatprep.subr.bf16.mxu0 0
    %159 = vmatpush2.bf16.msra.mxu0 0
    %160 = vmatprep.subr.bf16.mxu0 0
    %161 = vmatpush2.bf16.msra.mxu0 0
    %162 = vmatprep.subr.bf16.mxu0 0
    %163 = vmatpush2.bf16.msra.mxu0 0
    %164 = vmatprep.mubr.bf16.mxu0 0
    %165 = vmatmul.mubr.bf16.gmra.mxu0 %v130
    %v166 = vpop.f32.mrf.mxu0
    %v167 = vadd.f32 0.0, %v166
    %v168 = vpop.f32.mrf.mxu0
    %v169 = vpop.f32.mrf.mxu0
    %v170 = vpop.f32.mrf.mxu0
    %171 = vdwg.mxu0
    %v172 = vadd.f32 %v106, %v167
    %v173 = vtanh.pop %v172
    %vm174 = vcmask 253952
    %175 = vst.msk [vmem:[#allocation2] sm:$0x1] %vm174, %v173
    %v176 = vpack.c.bf16 %v173, %v173
    %v178 = vsel %vm67, %v176, 0
    %180 = vmatprep.subr.bf16.mxu0 0
    %181 = vmatpush1.bf16.msra.mxu0 0
    %182 = vmatprep.subr.bf16.mxu0 0
    %183 = vmatpush1.bf16.msra.mxu0 0
    %184 = vmatprep.subr.bf16.mxu0 0
    %185 = vmatpush1.bf16.msra.mxu0 0
    %186 = vmatprep.subr.bf16.mxu0 0
    %187 = vmatpush1.bf16.msra.mxu0 0
    %188 = vmatprep.subr.bf16.mxu0 0
    %189 = vmatpush1.bf16.msra.mxu0 0
    %190 = vmatprep.subr.bf16.mxu0 0
    %191 = vmatpush1.bf16.msra.mxu0 0
    %192 = vmatprep.subr.bf16.mxu0 0
    %193 = vmatpush1.bf16.msra.mxu0 %v126
    %194 = vmatprep.subr.bf16.mxu0 0
    %195 = vmatpush1.bf16.msra.mxu0 %v125
    %196 = vmatprep.subr.bf16.mxu0 0
    %197 = vmatpush2.bf16.msra.mxu0 0
    %198 = vmatprep.subr.bf16.mxu0 0
    %199 = vmatpush2.bf16.msra.mxu0 0
    %200 = vmatprep.subr.bf16.mxu0 0
    %201 = vmatpush2.bf16.msra.mxu0 0
    %202 = vmatprep.subr.bf16.mxu0 0
    %203 = vmatpush2.bf16.msra.mxu0 0
    %204 = vmatprep.subr.bf16.mxu0 0
    %205 = vmatpush2.bf16.msra.mxu0 0
    %206 = vmatprep.subr.bf16.mxu0 0
    %207 = vmatpush2.bf16.msra.mxu0 0
    %208 = vmatprep.subr.bf16.mxu0 0
    %209 = vmatpush2.bf16.msra.mxu0 0
    %210 = vmatprep.subr.bf16.mxu0 0
    %211 = vmatpush2.bf16.msra.mxu0 0
    %212 = vmatprep.mubr.bf16.mxu0 0
    %213 = vmatmul.mubr.bf16.gmra.mxu0 %v178
    %v214 = vpop.f32.mrf.mxu0
    %v215 = vadd.f32 0.0, %v214
    %v216 = vpop.f32.mrf.mxu0
    %v217 = vpop.f32.mrf.mxu0
    %v218 = vpop.f32.mrf.mxu0
    %219 = vdwg.mxu0
    %v221 = vrot.slane %v215, 7
    %v223 = vadd.f32 %v106, %v221
    %v224 = vtanh.pop %v223
    %vm225 = vcmask 254977
    %226 = vst.msk [vmem:[#allocation2] sm:$0x2] %vm225, %v224
    %v227 = vpack.c.bf16 %v224, %v224
    %v229 = vshrl.u32 %v227, 16
    %v232 = vsel %vm67, %v229, 0
    %234 = vmatprep.subr.bf16.mxu0 0
    %235 = vmatpush1.bf16.msra.mxu0 0
    %236 = vmatprep.subr.bf16.mxu0 0
    %237 = vmatpush1.bf16.msra.mxu0 0
    %238 = vmatprep.subr.bf16.mxu0 0
    %239 = vmatpush1.bf16.msra.mxu0 0
    %240 = vmatprep.subr.bf16.mxu0 0
    %241 = vmatpush1.bf16.msra.mxu0 0
    %242 = vmatprep.subr.bf16.mxu0 0
    %243 = vmatpush1.bf16.msra.mxu0 0
    %244 = vmatprep.subr.bf16.mxu0 0
    %245 = vmatpush1.bf16.msra.mxu0 0
    %246 = vmatprep.subr.bf16.mxu0 0
    %247 = vmatpush1.bf16.msra.mxu0 %v126
    %248 = vmatprep.subr.bf16.mxu0 0
    %249 = vmatpush1.bf16.msra.mxu0 %v125
    %250 = vmatprep.subr.bf16.mxu0 0
    %251 = vmatpush2.bf16.msra.mxu0 0
    %252 = vmatprep.subr.bf16.mxu0 0
    %253 = vmatpush2.bf16.msra.mxu0 0
    %254 = vmatprep.subr.bf16.mxu0 0
    %255 = vmatpush2.bf16.msra.mxu0 0
    %256 = vmatprep.subr.bf16.mxu0 0
    %257 = vmatpush2.bf16.msra.mxu0 0
    %258 = vmatprep.subr.bf16.mxu0 0
    %259 = vmatpush2.bf16.msra.mxu0 0
    %260 = vmatprep.subr.bf16.mxu0 0
    %261 = vmatpush2.bf16.msra.mxu0 0
    %262 = vmatprep.subr.bf16.mxu0 0
    %263 = vmatpush2.bf16.msra.mxu0 0
    %264 = vmatprep.subr.bf16.mxu0 0
    %265 = vmatpush2.bf16.msra.mxu0 0
    %266 = vmatprep.mubr.bf16.mxu0 0
    %267 = vmatmul.mubr.bf16.gmra.mxu0 %v232
    %v268 = vpop.f32.mrf.mxu0
    %v269 = vadd.f32 0.0, %v268
    %v270 = vpop.f32.mrf.mxu0
    %v271 = vpop.f32.mrf.mxu0
    %v272 = vpop.f32.mrf.mxu0
    %273 = vdwg.mxu0
    %v275 = vrot.slane %v269, 6
    %v277 = vadd.f32 %v106, %v275
    %v278 = vtanh.pop %v277
    %vm279 = vcmask 256002
    %280 = vst.msk [vmem:[#allocation2] sm:$0x4] %vm279, %v278
    %v281 = vpack.c.bf16 %v278, %v278
    %v283 = vrot.slane %v281, 1
    %v285 = vsel %vm67, %v283, 0
    %287 = vmatprep.subr.bf16.mxu0 0
    %288 = vmatpush1.bf16.msra.mxu0 0
    %289 = vmatprep.subr.bf16.mxu0 0
    %290 = vmatpush1.bf16.msra.mxu0 0
    %291 = vmatprep.subr.bf16.mxu0 0
    %292 = vmatpush1.bf16.msra.mxu0 0
    %293 = vmatprep.subr.bf16.mxu0 0
    %294 = vmatpush1.bf16.msra.mxu0 0
    %295 = vmatprep.subr.bf16.mxu0 0
    %296 = vmatpush1.bf16.msra.mxu0 0
    %297 = vmatprep.subr.bf16.mxu0 0
    %298 = vmatpush1.bf16.msra.mxu0 0
    %299 = vmatprep.subr.bf16.mxu0 0
    %300 = vmatpush1.bf16.msra.mxu0 %v126
    %301 = vmatprep.subr.bf16.mxu0 0
    %302 = vmatpush1.bf16.msra.mxu0 %v125
    %303 = vmatprep.subr.bf16.mxu0 0
    %304 = vmatpush2.bf16.msra.mxu0 0
    %305 = vmatprep.subr.bf16.mxu0 0
    %306 = vmatpush2.bf16.msra.mxu0 0
    %307 = vmatprep.subr.bf16.mxu0 0
    %308 = vmatpush2.bf16.msra.mxu0 0
    %309 = vmatprep.subr.bf16.mxu0 0
    %310 = vmatpush2.bf16.msra.mxu0 0
    %311 = vmatprep.subr.bf16.mxu0 0
    %312 = vmatpush2.bf16.msra.mxu0 0
    %313 = vmatprep.subr.bf16.mxu0 0
    %314 = vmatpush2.bf16.msra.mxu0 0
    %315 = vmatprep.subr.bf16.mxu0 0
    %316 = vmatpush2.bf16.msra.mxu0 0
    %317 = vmatprep.subr.bf16.mxu0 0
    %318 = vmatpush2.bf16.msra.mxu0 0
    %319 = vmatprep.mubr.bf16.mxu0 0
    %320 = vmatmul.mubr.bf16.gmra.mxu0 %v285
    %v321 = vpop.f32.mrf.mxu0
    %v322 = vadd.f32 0.0, %v321
    %v323 = vpop.f32.mrf.mxu0
    %v324 = vpop.f32.mrf.mxu0
    %v325 = vpop.f32.mrf.mxu0
    %326 = vdwg.mxu0
    %v328 = vrot.slane %v322, 5
    %v330 = vadd.f32 %v106, %v328
    %v331 = vtanh.pop %v330
    %vm332 = vcmask 257027
    %333 = vst.msk [vmem:[#allocation2] sm:$0x8] %vm332, %v331
    %v334 = vpack.c.bf16 %v331, %v331
    %v336 = vshrl.u32 %v334, 16
    %v338 = vrot.slane %v336, 1
    %v340 = vsel %vm67, %v338, 0
    %342 = vmatprep.subr.bf16.mxu0 0
    %343 = vmatpush1.bf16.msra.mxu0 0
    %344 = vmatprep.subr.bf16.mxu0 0
    %345 = vmatpush1.bf16.msra.mxu0 0
    %346 = vmatprep.subr.bf16.mxu0 0
    %347 = vmatpush1.bf16.msra.mxu0 0
    %348 = vmatprep.subr.bf16.mxu0 0
    %349 = vmatpush1.bf16.msra.mxu0 0
    %350 = vmatprep.subr.bf16.mxu0 0
    %351 = vmatpush1.bf16.msra.mxu0 0
    %352 = vmatprep.subr.bf16.mxu0 0
    %353 = vmatpush1.bf16.msra.mxu0 0
    %354 = vmatprep.subr.bf16.mxu0 0
    %355 = vmatpush1.bf16.msra.mxu0 %v126
    %356 = vmatprep.subr.bf16.mxu0 0
    %357 = vmatpush1.bf16.msra.mxu0 %v125
    %358 = vmatprep.subr.bf16.mxu0 0
    %359 = vmatpush2.bf16.msra.mxu0 0
    %360 = vmatprep.subr.bf16.mxu0 0
    %361 = vmatpush2.bf16.msra.mxu0 0
    %362 = vmatprep.subr.bf16.mxu0 0
    %363 = vmatpush2.bf16.msra.mxu0 0
    %364 = vmatprep.subr.bf16.mxu0 0
    %365 = vmatpush2.bf16.msra.mxu0 0
    %366 = vmatprep.subr.bf16.mxu0 0
    %367 = vmatpush2.bf16.msra.mxu0 0
    %368 = vmatprep.subr.bf16.mxu0 0
    %369 = vmatpush2.bf16.msra.mxu0 0
    %370 = vmatprep.subr.bf16.mxu0 0
    %371 = vmatpush2.bf16.msra.mxu0 0
    %372 = vmatprep.subr.bf16.mxu0 0
    %373 = vmatpush2.bf16.msra.mxu0 0
    %374 = vmatprep.mubr.bf16.mxu0 0
    %375 = vmatmul.mubr.bf16.gmra.mxu0 %v340
    %v376 = vpop.f32.mrf.mxu0
    %v377 = vadd.f32 0.0, %v376
    %v378 = vpop.f32.mrf.mxu0
    %v379 = vpop.f32.mrf.mxu0
    %v380 = vpop.f32.mrf.mxu0
    %381 = vdwg.mxu0
    %v383 = vrot.slane %v377, 4
    %v385 = vadd.f32 %v106, %v383
    %v386 = vtanh.pop %v385
    %vm387 = vcmask 258052
    %388 = vst.msk [vmem:[#allocation2] sm:$0x10] %vm387, %v386
    %v389 = vpack.c.bf16 %v386, %v386
    %v391 = vrot.slane %v389, 2
    %v393 = vsel %vm67, %v391, 0
    %395 = vmatprep.subr.bf16.mxu0 0
    %396 = vmatpush1.bf16.msra.mxu0 0
    %397 = vmatprep.subr.bf16.mxu0 0
    %398 = vmatpush1.bf16.msra.mxu0 0
    %399 = vmatprep.subr.bf16.mxu0 0
    %400 = vmatpush1.bf16.msra.mxu0 0
    %401 = vmatprep.subr.bf16.mxu0 0
    %402 = vmatpush1.bf16.msra.mxu0 0
    %403 = vmatprep.subr.bf16.mxu0 0
    %404 = vmatpush1.bf16.msra.mxu0 0
    %405 = vmatprep.subr.bf16.mxu0 0
    %406 = vmatpush1.bf16.msra.mxu0 0
    %407 = vmatprep.subr.bf16.mxu0 0
    %408 = vmatpush1.bf16.msra.mxu0 %v126
    %409 = vmatprep.subr.bf16.mxu0 0
    %410 = vmatpush1.bf16.msra.mxu0 %v125
    %411 = vmatprep.subr.bf16.mxu0 0
    %412 = vmatpush2.bf16.msra.mxu0 0
    %413 = vmatprep.subr.bf16.mxu0 0
    %414 = vmatpush2.bf16.msra.mxu0 0
    %415 = vmatprep.subr.bf16.mxu0 0
    %416 = vmatpush2.bf16.msra.mxu0 0
    %417 = vmatprep.subr.bf16.mxu0 0
    %418 = vmatpush2.bf16.msra.mxu0 0
    %419 = vmatprep.subr.bf16.mxu0 0
    %420 = vmatpush2.bf16.msra.mxu0 0
    %421 = vmatprep.subr.bf16.mxu0 0
    %422 = vmatpush2.bf16.msra.mxu0 0
    %423 = vmatprep.subr.bf16.mxu0 0
    %424 = vmatpush2.bf16.msra.mxu0 0
    %425 = vmatprep.subr.bf16.mxu0 0
    %426 = vmatpush2.bf16.msra.mxu0 0
    %427 = vmatprep.mubr.bf16.mxu0 0
    %428 = vmatmul.mubr.bf16.gmra.mxu0 %v393
    %v429 = vpop.f32.mrf.mxu0
    %v430 = vadd.f32 0.0, %v429
    %v431 = vpop.f32.mrf.mxu0
    %v432 = vpop.f32.mrf.mxu0
    %v433 = vpop.f32.mrf.mxu0
    %434 = vdwg.mxu0
    %v436 = vrot.slane %v430, 3
    %v438 = vadd.f32 %v106, %v436
    %v439 = vtanh.pop %v438
    %vm440 = vcmask 259077
    %441 = vst.msk [vmem:[#allocation2] sm:$0x20] %vm440, %v439
    %v442 = vpack.c.bf16 %v439, %v439
    %v444 = vshrl.u32 %v442, 16
    %v446 = vrot.slane %v444, 2
    %v448 = vsel %vm67, %v446, 0
    %450 = vmatprep.subr.bf16.mxu0 0
    %451 = vmatpush1.bf16.msra.mxu0 0
    %452 = vmatprep.subr.bf16.mxu0 0
    %453 = vmatpush1.bf16.msra.mxu0 0
    %454 = vmatprep.subr.bf16.mxu0 0
    %455 = vmatpush1.bf16.msra.mxu0 0
    %456 = vmatprep.subr.bf16.mxu0 0
    %457 = vmatpush1.bf16.msra.mxu0 0
    %458 = vmatprep.subr.bf16.mxu0 0
    %459 = vmatpush1.bf16.msra.mxu0 0
    %460 = vmatprep.subr.bf16.mxu0 0
    %461 = vmatpush1.bf16.msra.mxu0 0
    %462 = vmatprep.subr.bf16.mxu0 0
    %463 = vmatpush1.bf16.msra.mxu0 %v126
    %464 = vmatprep.subr.bf16.mxu0 0
    %465 = vmatpush1.bf16.msra.mxu0 %v125
    %466 = vmatprep.subr.bf16.mxu0 0
    %467 = vmatpush2.bf16.msra.mxu0 0
    %468 = vmatprep.subr.bf16.mxu0 0
    %469 = vmatpush2.bf16.msra.mxu0 0
    %470 = vmatprep.subr.bf16.mxu0 0
    %471 = vmatpush2.bf16.msra.mxu0 0
    %472 = vmatprep.subr.bf16.mxu0 0
    %473 = vmatpush2.bf16.msra.mxu0 0
    %474 = vmatprep.subr.bf16.mxu0 0
    %475 = vmatpush2.bf16.msra.mxu0 0
    %476 = vmatprep.subr.bf16.mxu0 0
    %477 = vmatpush2.bf16.msra.mxu0 0
    %478 = vmatprep.subr.bf16.mxu0 0
    %479 = vmatpush2.bf16.msra.mxu0 0
    %480 = vmatprep.subr.bf16.mxu0 0
    %481 = vmatpush2.bf16.msra.mxu0 0
    %482 = vmatprep.mubr.bf16.mxu0 0
    %483 = vmatmul.mubr.bf16.gmra.mxu0 %v448
    %v484 = vpop.f32.mrf.mxu0
    %v485 = vadd.f32 0.0, %v484
    %v486 = vpop.f32.mrf.mxu0
    %v487 = vpop.f32.mrf.mxu0
    %v488 = vpop.f32.mrf.mxu0
    %489 = vdwg.mxu0
    %v491 = vrot.slane %v485, 2
    %v493 = vadd.f32 %v106, %v491
    %v494 = vtanh.pop %v493
    %vm495 = vcmask 260102
    %496 = vst.msk [vmem:[#allocation2] sm:$0x40] %vm495, %v494
    %v497 = vpack.c.bf16 %v494, %v494
    %v499 = vrot.slane %v497, 3
    %v501 = vsel %vm67, %v499, 0
    %503 = vmatprep.subr.bf16.mxu0 0
    %504 = vmatpush1.bf16.msra.mxu0 0
    %505 = vmatprep.subr.bf16.mxu0 0
    %506 = vmatpush1.bf16.msra.mxu0 0
    %507 = vmatprep.subr.bf16.mxu0 0
    %508 = vmatpush1.bf16.msra.mxu0 0
    %509 = vmatprep.subr.bf16.mxu0 0
    %510 = vmatpush1.bf16.msra.mxu0 0
    %511 = vmatprep.subr.bf16.mxu0 0
    %512 = vmatpush1.bf16.msra.mxu0 0
    %513 = vmatprep.subr.bf16.mxu0 0
    %514 = vmatpush1.bf16.msra.mxu0 0
    %515 = vmatprep.subr.bf16.mxu0 0
    %516 = vmatpush1.bf16.msra.mxu0 %v126
    %517 = vmatprep.subr.bf16.mxu0 0
    %518 = vmatpush1.bf16.msra.mxu0 %v125
    %519 = vmatprep.subr.bf16.mxu0 0
    %520 = vmatpush2.bf16.msra.mxu0 0
    %521 = vmatprep.subr.bf16.mxu0 0
    %522 = vmatpush2.bf16.msra.mxu0 0
    %523 = vmatprep.subr.bf16.mxu0 0
    %524 = vmatpush2.bf16.msra.mxu0 0
    %525 = vmatprep.subr.bf16.mxu0 0
    %526 = vmatpush2.bf16.msra.mxu0 0
    %527 = vmatprep.subr.bf16.mxu0 0
    %528 = vmatpush2.bf16.msra.mxu0 0
    %529 = vmatprep.subr.bf16.mxu0 0
    %530 = vmatpush2.bf16.msra.mxu0 0
    %531 = vmatprep.subr.bf16.mxu0 0
    %532 = vmatpush2.bf16.msra.mxu0 0
    %533 = vmatprep.subr.bf16.mxu0 0
    %534 = vmatpush2.bf16.msra.mxu0 0
    %535 = vmatprep.mubr.bf16.mxu0 0
    %536 = vmatmul.mubr.bf16.gmra.mxu0 %v501
    %v537 = vpop.f32.mrf.mxu0
    %v538 = vadd.f32 0.0, %v537
    %v539 = vpop.f32.mrf.mxu0
    %v540 = vpop.f32.mrf.mxu0
    %v541 = vpop.f32.mrf.mxu0
    %542 = vdwg.mxu0
    %v544 = vrot.slane %v538, 1
    %v546 = vadd.f32 %v106, %v544
    %v547 = vtanh.pop %v546
    %vm548 = vcmask 261127
    %549 = vst.msk [vmem:[#allocation2] sm:$0x80] %vm548, %v547
    %v550 = vld [vmem:[#allocation2] sm:$0xff]
    %v551 = vpack.c.bf16 %v550, %v550
    %v552 = vld [vmem:[%s5] sm:$0xf]
    %v553 = vld [vmem:[%s5 + $0x4] sm:$0xf]
    %v554 = vld [vmem:[%s5 + $0x8] sm:$0xf]
    %v555 = vld [vmem:[%s5 + $0xc] sm:$0xf]
    %v556 = vld [vmem:[%s6] sm:$0x1]
    %v558 = vlaneseq
    %v559 = vshrl.u32 %v558, 7
    %v560 = vsub.s32 0, %v559
    %v561 = vrot.slane %v556, %v560
    %v567 = vunpack.c.l.b16 %v552
    %v568 = vunpack.c.l.b16 %v553
    %v569 = vunpack.c.l.b16 %v554
    %v570 = vunpack.c.l.b16 %v555
    %v571 = vpack.c.b16 %v568, %v567
    %v572 = vpack.c.b16 %v570, %v569
    %v576 = vsel %vm67, %v551, 0
    %578 = vmatprep.subr.bf16.mxu0 0
    %579 = vmatpush1.bf16.msra.mxu0 0
    %580 = vmatprep.subr.bf16.mxu0 0
    %581 = vmatpush1.bf16.msra.mxu0 0
    %582 = vmatprep.subr.bf16.mxu0 0
    %583 = vmatpush1.bf16.msra.mxu0 0
    %584 = vmatprep.subr.bf16.mxu0 0
    %585 = vmatpush1.bf16.msra.mxu0 0
    %586 = vmatprep.subr.bf16.mxu0 0
    %587 = vmatpush1.bf16.msra.mxu0 0
    %588 = vmatprep.subr.bf16.mxu0 0
    %589 = vmatpush1.bf16.msra.mxu0 0
    %590 = vmatprep.subr.bf16.mxu0 0
    %591 = vmatpush1.bf16.msra.mxu0 %v572
    %592 = vmatprep.subr.bf16.mxu0 0
    %593 = vmatpush1.bf16.msra.mxu0 %v571
    %594 = vmatprep.subr.bf16.mxu0 0
    %595 = vmatpush2.bf16.msra.mxu0 0
    %596 = vmatprep.subr.bf16.mxu0 0
    %597 = vmatpush2.bf16.msra.mxu0 0
    %598 = vmatprep.subr.bf16.mxu0 0
    %599 = vmatpush2.bf16.msra.mxu0 0
    %600 = vmatprep.subr.bf16.mxu0 0
    %601 = vmatpush2.bf16.msra.mxu0 0
    %602 = vmatprep.subr.bf16.mxu0 0
    %603 = vmatpush2.bf16.msra.mxu0 0
    %604 = vmatprep.subr.bf16.mxu0 0
    %605 = vmatpush2.bf16.msra.mxu0 0
    %606 = vmatprep.subr.bf16.mxu0 0
    %607 = vmatpush2.bf16.msra.mxu0 0
    %608 = vmatprep.subr.bf16.mxu0 0
    %609 = vmatpush2.bf16.msra.mxu0 0
    %610 = vmatprep.mubr.bf16.mxu0 0
    %611 = vmatmul.mubr.bf16.gmra.mxu0 %v576
    %v612 = vpop.f32.mrf.mxu0
    %v613 = vadd.f32 %v561, %v612
    %v614 = vpop.f32.mrf.mxu0
    %v615 = vpop.f32.mrf.mxu0
    %v616 = vpop.f32.mrf.mxu0
    %617 = vdwg.mxu0
    %vm618 = vcmask 130048
    %619 = vst.msk [vmem:[#allocation6] sm:$0xff] %vm618, %v613
    %620 = vst.msk [vmem:[#allocation7 - $0x7] sm:$0x80] %vm548, %v547
    // Predicated region
    $region34: #{rnn_forward.1} parent=1 // pred_check
      _
    $region35: #{rnn_forward.1} parent=1 // pred_check_branch
      %622 = sbr.rel (0) target = $region37
    $region36: #{rnn_forward.1} parent=1 // pred_region
      %s624 = ssub.s32 128, 128
      %625 = vsyncadd [#allocation5], %s624
      %s627 = sshll.u32 [#allocation6], 4
      %s628 = int_to_ptr.vmem [resolvable:$true] %s627
      %630 = dma.vmem_to_hbm [thread:$0]  %s628, 128, %s7, [#allocation5]
    $region37: #{rnn_forward.1} parent=1 // pred_fallthru
      _
    // Predicated region
    $region38: #{rnn_forward.1} parent=1 // pred_check
      _
    $region39: #{rnn_forward.1} parent=1 // pred_check_branch
      %632 = sbr.rel (0) target = $region41
    $region40: #{rnn_forward.1} parent=1 // pred_region
      %s634 = ssub.s32 16, 16
      %635 = vsyncadd [#allocation8], %s634
      %s637 = sshll.u32 [#allocation7], 4
      %s638 = int_to_ptr.vmem [resolvable:$true] %s637
      %640 = dma.vmem_to_hbm [thread:$0]  %s638, 16, %s8, [#allocation8]
    $region41: #{rnn_forward.1} parent=1 // pred_fallthru
      _
    // Predicated region
    $region42: #{rnn_forward.1} parent=1 // pred_check
      _
    $region43: #{rnn_forward.1} parent=1 // pred_check_branch
      %642 = sbr.rel (0) target = $region45
    $region44: #{rnn_forward.1} parent=1 // pred_region
      %643 = dma.done [#allocation5], 128
    $region45: #{rnn_forward.1} parent=1 // pred_fallthru
      _
    // Predicated region
    $region46: #{rnn_forward.1} parent=1 // pred_check
      _
    $region47: #{rnn_forward.1} parent=1 // pred_check_branch
      %645 = sbr.rel (0) target = $region49
    $region48: #{rnn_forward.1} parent=1 // pred_region
      %646 = dma.done [#allocation8], 16
    $region49: #{rnn_forward.1} parent=1 // pred_fallthru
      _
    %647 = vsyncpa [#allocation4], 1
    %648 = vsyncpa [#allocation5], 1
    %649 = vsyncpa [#allocation8], 1

</llo_original>
